<compile_context>
chip_gen: v6e
topology: v6e:2x2x1
jax: 0.10.0
libtpu: 0.0.40
codegen_flags: <defaults>
</compile_context>

<pallas_src>
import jax
import jax.numpy as jnp
from jax.experimental import pallas as pl
from jax.experimental.pallas import tpu as pltpu

# Packed parameter layout (flat float32, torch (out_features, in_features) order):
#   [ 0:24)  W1  (4 x 6, row-major)
#   [24:28)  b1
#   [28:36)  W2  (2 x 4, row-major)
#   [36:38)  b2
#   [38:40)  W3  (1 x 2)
#   [40]     b3
_W1, _B1, _W2, _B2, _W3, _B3 = 0, 24, 28, 36, 38, 40
_PACKED_LEN = 48  # padded to a multiple of 8 words
_LANE = 128


def mlp_kernel(p_ref, x_ref, o_ref):
    # p_ref: (48,) f32 in SMEM (packed weights/biases, scalar reads)
    # x_ref: (6, TB) f32 in VMEM (batch on lanes)
    # o_ref: (1, TB) f32 in VMEM (lane-dense output)
    x = x_ref[...]                       # (6, TB)
    tb = x.shape[1]

    # Layer 1: 4 units, unrolled VPU FMAs, bias folded into accumulator init.
    s1 = []
    for j in range(4):
        acc = jnp.full((1, tb), p_ref[_B1 + j], dtype=jnp.float32)
        for k in range(6):
            acc = acc + p_ref[_W1 + 6 * j + k] * x[k:k + 1, :]
        s1.append(jax.nn.sigmoid(acc))   # exp -> EUP slot

    # Layer 2: 2 units.
    s2 = []
    for j in range(2):
        acc = jnp.full((1, tb), p_ref[_B2 + j], dtype=jnp.float32)
        for k in range(4):
            acc = acc + p_ref[_W2 + 4 * j + k] * s1[k]
        s2.append(jax.nn.sigmoid(acc))

    # Layer 3: 1 unit (two elementwise mul-adds).
    acc = jnp.full((1, tb), p_ref[_B3], dtype=jnp.float32)
    acc = acc + p_ref[_W3 + 0] * s2[0] + p_ref[_W3 + 1] * s2[1]
    o_ref[...] = jax.nn.sigmoid(acc)


def _round_up(n, m):
    return ((n + m - 1) // m) * m


def pack_params(w1, b1, w2, b2, w3, b3):
    """Concatenate all weights/biases (torch (out,in) layout) into one f32 slab."""
    flat = jnp.concatenate([
        w1.reshape(-1), b1.reshape(-1),
        w2.reshape(-1), b2.reshape(-1),
        w3.reshape(-1), b3.reshape(-1),
    ]).astype(jnp.float32)
    return jnp.pad(flat, (0, _PACKED_LEN - flat.shape[0]))


def mlp_forward(x, packed_params):
    """x: (B, 6) float32 -> (B, 1) float32."""
    B = x.shape[0]
    x = x.astype(jnp.float32)

    # Batch tile: multiple of 128 lanes, capped at 1024 rows per block.
    tb = min(1024, _round_up(B, _LANE))
    Bp = _round_up(B, tb)

    xt = x.T                                # (6, B): batch -> lane axis
    if Bp != B:
        xt = jnp.pad(xt, ((0, 0), (0, Bp - B)))

    n_blocks = Bp // tb
    flops = 2 * 34 * Bp                     # 4*6 + 2*4 + 1*2 MACs per row
    cost = pl.CostEstimate(
        flops=flops,
        transcendentals=7 * Bp,             # 7 sigmoids per row
        bytes_accessed=4 * (6 * Bp + Bp + _PACKED_LEN),
    )

    out = pl.pallas_call(
        mlp_kernel,
        out_shape=jax.ShapeDtypeStruct((1, Bp), jnp.float32),
        grid_spec=pl.GridSpec(
            grid=(n_blocks,),
            in_specs=[
                # Single packed parameter slab, resident in SMEM for all blocks.
                pl.BlockSpec(memory_space=pltpu.MemorySpace.SMEM),
                # Activations: one lane-dense batch tile per grid step.
                pl.BlockSpec((6, tb), lambda i: (0, i)),
            ],
            out_specs=pl.BlockSpec((1, tb), lambda i: (0, i)),
        ),
        compiler_params=pltpu.CompilerParams(
            dimension_semantics=("parallel",)),
        cost_estimate=cost,
    )(packed_params, xt)

    return out[0, :B].reshape(B, 1)


def init_params(key):
    # Deterministic init mimicking torch.nn.Linear: uniform(-1/sqrt(fan_in), +),
    # weights stored as (out_features, in_features).
    def linear(key, fan_in, fan_out):
        kw, kb = jax.random.split(key)
        bound = 1.0 / jnp.sqrt(fan_in)
        w = jax.random.uniform(kw, (fan_out, fan_in), jnp.float32, -bound, bound)
        b = jax.random.uniform(kb, (fan_out,), jnp.float32, -bound, bound)
        return w, b

    k1, k2, k3 = jax.random.split(key, 3)
    w1, b1 = linear(k1, 6, 4)
    w2, b2 = linear(k2, 4, 2)
    w3, b3 = linear(k3, 2, 1)
    return w1, b1, w2, b2, w3, b3


if __name__ == "__main__":
    key = jax.random.PRNGKey(0)
    kx, kp = jax.random.split(key)

    B = 8
    x = jax.random.normal(kx, (B, 6), jnp.float32)
    params = init_params(kp)
    packed = pack_params(*params)

    out = jax.block_until_ready(mlp_forward(x, packed))

    # Pure-JAX reference (torch Linear: y = x @ W.T + b).
    w1, b1, w2, b2, w3, b3 = params
    ref = jax.nn.sigmoid(x @ w1.T + b1)
    ref = jax.nn.sigmoid(ref @ w2.T + b2)
    ref = jax.nn.sigmoid(ref @ w3.T + b3)

    assert out.shape == (B, 1)
    assert jnp.allclose(out, ref, atol=1e-5, rtol=1e-5)

    print("KERNEL_OK")
</pallas_src>

<mosaic_0001>
module attributes {stable_mosaic.version = 11 : i64} {
  func.func @mlp_kernel(%arg0: i32, %arg1: memref<48xf32, #tpu.memory_space<smem>>, %arg2: memref<6x128xf32, #tpu.memory_space<vmem>>, %arg3: memref<1x128xf32, #tpu.memory_space<vmem>>) attributes {dimension_semantics = [#tpu.dimension_semantics<parallel>], iteration_bounds = array<i64: 1>, scalar_prefetch = 0 : i64, scratch_operands = 0 : i64, tpu.core_type = #tpu.core_type<tc>, window_params = [{transform_indices = @transform_0, window_bounds = array<i64: 48>}, {transform_indices = @transform_1, window_bounds = array<i64: 6, 128>}, {transform_indices = @transform_2, window_bounds = array<i64: 1, 128>}]} {
    %c0 = arith.constant 0 : index
    %c0_0 = arith.constant 0 : index
    %0 = vector.load %arg2[%c0, %c0_0] : memref<6x128xf32, #tpu.memory_space<vmem>>, vector<6x128xf32>
    %c24 = arith.constant 24 : index
    %1 = memref.load %arg1[%c24] : memref<48xf32, #tpu.memory_space<smem>>
    %2 = vector.broadcast %1 : f32 to vector<1x128xf32>
    %c0_1 = arith.constant 0 : index
    %3 = memref.load %arg1[%c0_1] : memref<48xf32, #tpu.memory_space<smem>>
    %4 = vector.extract_strided_slice %0 {offsets = [0, 0], sizes = [1, 128], strides = [1, 1]} : vector<6x128xf32> to vector<1x128xf32>
    %5 = vector.broadcast %3 : f32 to vector<1x128xf32>
    %6 = arith.mulf %5, %4 : vector<1x128xf32>
    %7 = arith.addf %2, %6 : vector<1x128xf32>
    %c1 = arith.constant 1 : index
    %8 = memref.load %arg1[%c1] : memref<48xf32, #tpu.memory_space<smem>>
    %9 = vector.extract_strided_slice %0 {offsets = [1, 0], sizes = [1, 128], strides = [1, 1]} : vector<6x128xf32> to vector<1x128xf32>
    %10 = vector.broadcast %8 : f32 to vector<1x128xf32>
    %11 = arith.mulf %10, %9 : vector<1x128xf32>
    %12 = arith.addf %7, %11 : vector<1x128xf32>
    %c2 = arith.constant 2 : index
    %13 = memref.load %arg1[%c2] : memref<48xf32, #tpu.memory_space<smem>>
    %14 = vector.extract_strided_slice %0 {offsets = [2, 0], sizes = [1, 128], strides = [1, 1]} : vector<6x128xf32> to vector<1x128xf32>
    %15 = vector.broadcast %13 : f32 to vector<1x128xf32>
    %16 = arith.mulf %15, %14 : vector<1x128xf32>
    %17 = arith.addf %12, %16 : vector<1x128xf32>
    %c3 = arith.constant 3 : index
    %18 = memref.load %arg1[%c3] : memref<48xf32, #tpu.memory_space<smem>>
    %19 = vector.extract_strided_slice %0 {offsets = [3, 0], sizes = [1, 128], strides = [1, 1]} : vector<6x128xf32> to vector<1x128xf32>
    %20 = vector.broadcast %18 : f32 to vector<1x128xf32>
    %21 = arith.mulf %20, %19 : vector<1x128xf32>
    %22 = arith.addf %17, %21 : vector<1x128xf32>
    %c4 = arith.constant 4 : index
    %23 = memref.load %arg1[%c4] : memref<48xf32, #tpu.memory_space<smem>>
    %24 = vector.extract_strided_slice %0 {offsets = [4, 0], sizes = [1, 128], strides = [1, 1]} : vector<6x128xf32> to vector<1x128xf32>
    %25 = vector.broadcast %23 : f32 to vector<1x128xf32>
    %26 = arith.mulf %25, %24 : vector<1x128xf32>
    %27 = arith.addf %22, %26 : vector<1x128xf32>
    %c5 = arith.constant 5 : index
    %28 = memref.load %arg1[%c5] : memref<48xf32, #tpu.memory_space<smem>>
    %29 = vector.extract_strided_slice %0 {offsets = [5, 0], sizes = [1, 128], strides = [1, 1]} : vector<6x128xf32> to vector<1x128xf32>
    %30 = vector.broadcast %28 : f32 to vector<1x128xf32>
    %31 = arith.mulf %30, %29 : vector<1x128xf32>
    %32 = arith.addf %27, %31 : vector<1x128xf32>
    %33 = arith.negf %32 : vector<1x128xf32>
    %34 = math.exp %33 : vector<1x128xf32>
    %cst = arith.constant 1.000000e+00 : f32
    %35 = vector.broadcast %cst : f32 to vector<1x128xf32>
    %36 = arith.addf %35, %34 : vector<1x128xf32>
    %37 = arith.divf %35, %36 : vector<1x128xf32>
    %c25 = arith.constant 25 : index
    %38 = memref.load %arg1[%c25] : memref<48xf32, #tpu.memory_space<smem>>
    %39 = vector.broadcast %38 : f32 to vector<1x128xf32>
    %c6 = arith.constant 6 : index
    %40 = memref.load %arg1[%c6] : memref<48xf32, #tpu.memory_space<smem>>
    %41 = vector.extract_strided_slice %0 {offsets = [0, 0], sizes = [1, 128], strides = [1, 1]} : vector<6x128xf32> to vector<1x128xf32>
    %42 = vector.broadcast %40 : f32 to vector<1x128xf32>
    %43 = arith.mulf %42, %41 : vector<1x128xf32>
    %44 = arith.addf %39, %43 : vector<1x128xf32>
    %c7 = arith.constant 7 : index
    %45 = memref.load %arg1[%c7] : memref<48xf32, #tpu.memory_space<smem>>
    %46 = vector.extract_strided_slice %0 {offsets = [1, 0], sizes = [1, 128], strides = [1, 1]} : vector<6x128xf32> to vector<1x128xf32>
    %47 = vector.broadcast %45 : f32 to vector<1x128xf32>
    %48 = arith.mulf %47, %46 : vector<1x128xf32>
    %49 = arith.addf %44, %48 : vector<1x128xf32>
    %c8 = arith.constant 8 : index
    %50 = memref.load %arg1[%c8] : memref<48xf32, #tpu.memory_space<smem>>
    %51 = vector.extract_strided_slice %0 {offsets = [2, 0], sizes = [1, 128], strides = [1, 1]} : vector<6x128xf32> to vector<1x128xf32>
    %52 = vector.broadcast %50 : f32 to vector<1x128xf32>
    %53 = arith.mulf %52, %51 : vector<1x128xf32>
    %54 = arith.addf %49, %53 : vector<1x128xf32>
    %c9 = arith.constant 9 : index
    %55 = memref.load %arg1[%c9] : memref<48xf32, #tpu.memory_space<smem>>
    %56 = vector.extract_strided_slice %0 {offsets = [3, 0], sizes = [1, 128], strides = [1, 1]} : vector<6x128xf32> to vector<1x128xf32>
    %57 = vector.broadcast %55 : f32 to vector<1x128xf32>
    %58 = arith.mulf %57, %56 : vector<1x128xf32>
    %59 = arith.addf %54, %58 : vector<1x128xf32>
    %c10 = arith.constant 10 : index
    %60 = memref.load %arg1[%c10] : memref<48xf32, #tpu.memory_space<smem>>
    %61 = vector.extract_strided_slice %0 {offsets = [4, 0], sizes = [1, 128], strides = [1, 1]} : vector<6x128xf32> to vector<1x128xf32>
    %62 = vector.broadcast %60 : f32 to vector<1x128xf32>
    %63 = arith.mulf %62, %61 : vector<1x128xf32>
    %64 = arith.addf %59, %63 : vector<1x128xf32>
    %c11 = arith.constant 11 : index
    %65 = memref.load %arg1[%c11] : memref<48xf32, #tpu.memory_space<smem>>
    %66 = vector.extract_strided_slice %0 {offsets = [5, 0], sizes = [1, 128], strides = [1, 1]} : vector<6x128xf32> to vector<1x128xf32>
    %67 = vector.broadcast %65 : f32 to vector<1x128xf32>
    %68 = arith.mulf %67, %66 : vector<1x128xf32>
    %69 = arith.addf %64, %68 : vector<1x128xf32>
    %70 = arith.negf %69 : vector<1x128xf32>
    %71 = math.exp %70 : vector<1x128xf32>
    %cst_2 = arith.constant 1.000000e+00 : f32
    %72 = vector.broadcast %cst_2 : f32 to vector<1x128xf32>
    %73 = arith.addf %72, %71 : vector<1x128xf32>
    %74 = arith.divf %72, %73 : vector<1x128xf32>
    %c26 = arith.constant 26 : index
    %75 = memref.load %arg1[%c26] : memref<48xf32, #tpu.memory_space<smem>>
    %76 = vector.broadcast %75 : f32 to vector<1x128xf32>
    %c12 = arith.constant 12 : index
    %77 = memref.load %arg1[%c12] : memref<48xf32, #tpu.memory_space<smem>>
    %78 = vector.extract_strided_slice %0 {offsets = [0, 0], sizes = [1, 128], strides = [1, 1]} : vector<6x128xf32> to vector<1x128xf32>
    %79 = vector.broadcast %77 : f32 to vector<1x128xf32>
    %80 = arith.mulf %79, %78 : vector<1x128xf32>
    %81 = arith.addf %76, %80 : vector<1x128xf32>
    %c13 = arith.constant 13 : index
    %82 = memref.load %arg1[%c13] : memref<48xf32, #tpu.memory_space<smem>>
    %83 = vector.extract_strided_slice %0 {offsets = [1, 0], sizes = [1, 128], strides = [1, 1]} : vector<6x128xf32> to vector<1x128xf32>
    %84 = vector.broadcast %82 : f32 to vector<1x128xf32>
    %85 = arith.mulf %84, %83 : vector<1x128xf32>
    %86 = arith.addf %81, %85 : vector<1x128xf32>
    %c14 = arith.constant 14 : index
    %87 = memref.load %arg1[%c14] : memref<48xf32, #tpu.memory_space<smem>>
    %88 = vector.extract_strided_slice %0 {offsets = [2, 0], sizes = [1, 128], strides = [1, 1]} : vector<6x128xf32> to vector<1x128xf32>
    %89 = vector.broadcast %87 : f32 to vector<1x128xf32>
    %90 = arith.mulf %89, %88 : vector<1x128xf32>
    %91 = arith.addf %86, %90 : vector<1x128xf32>
    %c15 = arith.constant 15 : index
    %92 = memref.load %arg1[%c15] : memref<48xf32, #tpu.memory_space<smem>>
    %93 = vector.extract_strided_slice %0 {offsets = [3, 0], sizes = [1, 128], strides = [1, 1]} : vector<6x128xf32> to vector<1x128xf32>
    %94 = vector.broadcast %92 : f32 to vector<1x128xf32>
    %95 = arith.mulf %94, %93 : vector<1x128xf32>
    %96 = arith.addf %91, %95 : vector<1x128xf32>
    %c16 = arith.constant 16 : index
    %97 = memref.load %arg1[%c16] : memref<48xf32, #tpu.memory_space<smem>>
    %98 = vector.extract_strided_slice %0 {offsets = [4, 0], sizes = [1, 128], strides = [1, 1]} : vector<6x128xf32> to vector<1x128xf32>
    %99 = vector.broadcast %97 : f32 to vector<1x128xf32>
    %100 = arith.mulf %99, %98 : vector<1x128xf32>
    %101 = arith.addf %96, %100 : vector<1x128xf32>
    %c17 = arith.constant 17 : index
    %102 = memref.load %arg1[%c17] : memref<48xf32, #tpu.memory_space<smem>>
    %103 = vector.extract_strided_slice %0 {offsets = [5, 0], sizes = [1, 128], strides = [1, 1]} : vector<6x128xf32> to vector<1x128xf32>
    %104 = vector.broadcast %102 : f32 to vector<1x128xf32>
    %105 = arith.mulf %104, %103 : vector<1x128xf32>
    %106 = arith.addf %101, %105 : vector<1x128xf32>
    %107 = arith.negf %106 : vector<1x128xf32>
    %108 = math.exp %107 : vector<1x128xf32>
    %cst_3 = arith.constant 1.000000e+00 : f32
    %109 = vector.broadcast %cst_3 : f32 to vector<1x128xf32>
    %110 = arith.addf %109, %108 : vector<1x128xf32>
    %111 = arith.divf %109, %110 : vector<1x128xf32>
    %c27 = arith.constant 27 : index
    %112 = memref.load %arg1[%c27] : memref<48xf32, #tpu.memory_space<smem>>
    %113 = vector.broadcast %112 : f32 to vector<1x128xf32>
    %c18 = arith.constant 18 : index
    %114 = memref.load %arg1[%c18] : memref<48xf32, #tpu.memory_space<smem>>
    %115 = vector.extract_strided_slice %0 {offsets = [0, 0], sizes = [1, 128], strides = [1, 1]} : vector<6x128xf32> to vector<1x128xf32>
    %116 = vector.broadcast %114 : f32 to vector<1x128xf32>
    %117 = arith.mulf %116, %115 : vector<1x128xf32>
    %118 = arith.addf %113, %117 : vector<1x128xf32>
    %c19 = arith.constant 19 : index
    %119 = memref.load %arg1[%c19] : memref<48xf32, #tpu.memory_space<smem>>
    %120 = vector.extract_strided_slice %0 {offsets = [1, 0], sizes = [1, 128], strides = [1, 1]} : vector<6x128xf32> to vector<1x128xf32>
    %121 = vector.broadcast %119 : f32 to vector<1x128xf32>
    %122 = arith.mulf %121, %120 : vector<1x128xf32>
    %123 = arith.addf %118, %122 : vector<1x128xf32>
    %c20 = arith.constant 20 : index
    %124 = memref.load %arg1[%c20] : memref<48xf32, #tpu.memory_space<smem>>
    %125 = vector.extract_strided_slice %0 {offsets = [2, 0], sizes = [1, 128], strides = [1, 1]} : vector<6x128xf32> to vector<1x128xf32>
    %126 = vector.broadcast %124 : f32 to vector<1x128xf32>
    %127 = arith.mulf %126, %125 : vector<1x128xf32>
    %128 = arith.addf %123, %127 : vector<1x128xf32>
    %c21 = arith.constant 21 : index
    %129 = memref.load %arg1[%c21] : memref<48xf32, #tpu.memory_space<smem>>
    %130 = vector.extract_strided_slice %0 {offsets = [3, 0], sizes = [1, 128], strides = [1, 1]} : vector<6x128xf32> to vector<1x128xf32>
    %131 = vector.broadcast %129 : f32 to vector<1x128xf32>
    %132 = arith.mulf %131, %130 : vector<1x128xf32>
    %133 = arith.addf %128, %132 : vector<1x128xf32>
    %c22 = arith.constant 22 : index
    %134 = memref.load %arg1[%c22] : memref<48xf32, #tpu.memory_space<smem>>
    %135 = vector.extract_strided_slice %0 {offsets = [4, 0], sizes = [1, 128], strides = [1, 1]} : vector<6x128xf32> to vector<1x128xf32>
    %136 = vector.broadcast %134 : f32 to vector<1x128xf32>
    %137 = arith.mulf %136, %135 : vector<1x128xf32>
    %138 = arith.addf %133, %137 : vector<1x128xf32>
    %c23 = arith.constant 23 : index
    %139 = memref.load %arg1[%c23] : memref<48xf32, #tpu.memory_space<smem>>
    %140 = vector.extract_strided_slice %0 {offsets = [5, 0], sizes = [1, 128], strides = [1, 1]} : vector<6x128xf32> to vector<1x128xf32>
    %141 = vector.broadcast %139 : f32 to vector<1x128xf32>
    %142 = arith.mulf %141, %140 : vector<1x128xf32>
    %143 = arith.addf %138, %142 : vector<1x128xf32>
    %144 = arith.negf %143 : vector<1x128xf32>
    %145 = math.exp %144 : vector<1x128xf32>
    %cst_4 = arith.constant 1.000000e+00 : f32
    %146 = vector.broadcast %cst_4 : f32 to vector<1x128xf32>
    %147 = arith.addf %146, %145 : vector<1x128xf32>
    %148 = arith.divf %146, %147 : vector<1x128xf32>
    %c36 = arith.constant 36 : index
    %149 = memref.load %arg1[%c36] : memref<48xf32, #tpu.memory_space<smem>>
    %150 = vector.broadcast %149 : f32 to vector<1x128xf32>
    %c28 = arith.constant 28 : index
    %151 = memref.load %arg1[%c28] : memref<48xf32, #tpu.memory_space<smem>>
    %152 = vector.broadcast %151 : f32 to vector<1x128xf32>
    %153 = arith.mulf %152, %37 : vector<1x128xf32>
    %154 = arith.addf %150, %153 : vector<1x128xf32>
    %c29 = arith.constant 29 : index
    %155 = memref.load %arg1[%c29] : memref<48xf32, #tpu.memory_space<smem>>
    %156 = vector.broadcast %155 : f32 to vector<1x128xf32>
    %157 = arith.mulf %156, %74 : vector<1x128xf32>
    %158 = arith.addf %154, %157 : vector<1x128xf32>
    %c30 = arith.constant 30 : index
    %159 = memref.load %arg1[%c30] : memref<48xf32, #tpu.memory_space<smem>>
    %160 = vector.broadcast %159 : f32 to vector<1x128xf32>
    %161 = arith.mulf %160, %111 : vector<1x128xf32>
    %162 = arith.addf %158, %161 : vector<1x128xf32>
    %c31 = arith.constant 31 : index
    %163 = memref.load %arg1[%c31] : memref<48xf32, #tpu.memory_space<smem>>
    %164 = vector.broadcast %163 : f32 to vector<1x128xf32>
    %165 = arith.mulf %164, %148 : vector<1x128xf32>
    %166 = arith.addf %162, %165 : vector<1x128xf32>
    %167 = arith.negf %166 : vector<1x128xf32>
    %168 = math.exp %167 : vector<1x128xf32>
    %cst_5 = arith.constant 1.000000e+00 : f32
    %169 = vector.broadcast %cst_5 : f32 to vector<1x128xf32>
    %170 = arith.addf %169, %168 : vector<1x128xf32>
    %171 = arith.divf %169, %170 : vector<1x128xf32>
    %c37 = arith.constant 37 : index
    %172 = memref.load %arg1[%c37] : memref<48xf32, #tpu.memory_space<smem>>
    %173 = vector.broadcast %172 : f32 to vector<1x128xf32>
    %c32 = arith.constant 32 : index
    %174 = memref.load %arg1[%c32] : memref<48xf32, #tpu.memory_space<smem>>
    %175 = vector.broadcast %174 : f32 to vector<1x128xf32>
    %176 = arith.mulf %175, %37 : vector<1x128xf32>
    %177 = arith.addf %173, %176 : vector<1x128xf32>
    %c33 = arith.constant 33 : index
    %178 = memref.load %arg1[%c33] : memref<48xf32, #tpu.memory_space<smem>>
    %179 = vector.broadcast %178 : f32 to vector<1x128xf32>
    %180 = arith.mulf %179, %74 : vector<1x128xf32>
    %181 = arith.addf %177, %180 : vector<1x128xf32>
    %c34 = arith.constant 34 : index
    %182 = memref.load %arg1[%c34] : memref<48xf32, #tpu.memory_space<smem>>
    %183 = vector.broadcast %182 : f32 to vector<1x128xf32>
    %184 = arith.mulf %183, %111 : vector<1x128xf32>
    %185 = arith.addf %181, %184 : vector<1x128xf32>
    %c35 = arith.constant 35 : index
    %186 = memref.load %arg1[%c35] : memref<48xf32, #tpu.memory_space<smem>>
    %187 = vector.broadcast %186 : f32 to vector<1x128xf32>
    %188 = arith.mulf %187, %148 : vector<1x128xf32>
    %189 = arith.addf %185, %188 : vector<1x128xf32>
    %190 = arith.negf %189 : vector<1x128xf32>
    %191 = math.exp %190 : vector<1x128xf32>
    %cst_6 = arith.constant 1.000000e+00 : f32
    %192 = vector.broadcast %cst_6 : f32 to vector<1x128xf32>
    %193 = arith.addf %192, %191 : vector<1x128xf32>
    %194 = arith.divf %192, %193 : vector<1x128xf32>
    %c40 = arith.constant 40 : index
    %195 = memref.load %arg1[%c40] : memref<48xf32, #tpu.memory_space<smem>>
    %196 = vector.broadcast %195 : f32 to vector<1x128xf32>
    %c38 = arith.constant 38 : index
    %197 = memref.load %arg1[%c38] : memref<48xf32, #tpu.memory_space<smem>>
    %198 = vector.broadcast %197 : f32 to vector<1x128xf32>
    %199 = arith.mulf %198, %171 : vector<1x128xf32>
    %200 = arith.addf %196, %199 : vector<1x128xf32>
    %c39 = arith.constant 39 : index
    %201 = memref.load %arg1[%c39] : memref<48xf32, #tpu.memory_space<smem>>
    %202 = vector.broadcast %201 : f32 to vector<1x128xf32>
    %203 = arith.mulf %202, %194 : vector<1x128xf32>
    %204 = arith.addf %200, %203 : vector<1x128xf32>
    %205 = arith.negf %204 : vector<1x128xf32>
    %206 = math.exp %205 : vector<1x128xf32>
    %cst_7 = arith.constant 1.000000e+00 : f32
    %207 = vector.broadcast %cst_7 : f32 to vector<1x128xf32>
    %208 = arith.addf %207, %206 : vector<1x128xf32>
    %209 = arith.divf %207, %208 : vector<1x128xf32>
    %c0_8 = arith.constant 0 : index
    %c0_9 = arith.constant 0 : index
    %210 = vector.load %arg3[%c0_8, %c0_9] : memref<1x128xf32, #tpu.memory_space<vmem>>, vector<1x128xf32>
    tpu.vector_store %arg3[%c0_8, %c0_9], %209 {strides = array<i32>} : memref<1x128xf32, #tpu.memory_space<vmem>>, vector<1x128xf32>,
    return
  }
  func.func @transform_0(%arg0: i32) -> i32 {
    %c0_i32 = arith.constant 0 : i32
    %c0_i32_0 = arith.constant 0 : i32
    return %c0_i32 : i32
  }
  func.func @transform_1(%arg0: i32) -> (i32, i32) {
    %c0_i32 = arith.constant 0 : i32
    %c0_i32_0 = arith.constant 0 : i32
    return %c0_i32, %arg0 : i32, i32
  }
  func.func @transform_2(%arg0: i32) -> (i32, i32) {
    %c0_i32 = arith.constant 0 : i32
    %c0_i32_0 = arith.constant 0 : i32
    return %c0_i32, %arg0 : i32, i32
  }
}

</mosaic_0001>

<llo_original>
// kernel: tpu_custom_call.1
$region0: #{tpu_custom_call.1}
  #allocation0 [shape = 'u32[]', space=smem, size = 0x4, offset = 0x4, fixed_abs, tag = 'smem constant byte address 0x4 - core index']
  #allocation1 [shape = 'u32[144,128]{1,0:T(1,128)}', space=vmem, size = 0x12000, scoped, tag = 'internal scratch']
  %s0 = inlined_call_operand.hbm [shape: f32[48], index: 0, kind: input, shape index: {}]
  %s1 = inlined_call_operand.hbm [shape: f32[6,128], index: 1, kind: input, shape index: {}]
  %s2 = inlined_call_operand.hbm [shape: f32[1,128], index: 2, kind: output, shape index: {}]
  %s3 = sld [smem:[#allocation0]]
  $region26: #{tpu_custom_call.1} parent=0
    _
  %s5 = ssub.s32 1, %s3
  %s6 = scalar_select 0, %s5, %s3
  $region1: #{tpu_custom_call.1} parent=0
    #allocation2 [shape = 'u8[512]{0}', space=smem, size = 0x200, scoped, tag = 'input window, operand 0, single buffered']
    #allocation3 [shape = 's32[1]{0}', space=sflag, size = 0x4, scoped, tag = 'scoped memory for tpu_custom_call.1']
    #allocation4 [shape = 's32[1]{0}', space=sflag, size = 0x4, scoped, tag = 'scoped memory for tpu_custom_call.1']
    #allocation5 [shape = 's32[1]{0}', space=sflag, size = 0x4, scoped, tag = 'scoped memory for tpu_custom_call.1']
    #allocation6 [shape = 'u8[4096]{0}', space=vmem, size = 0x1000, scoped, tag = 'input window, operand 1, single buffered']
    #allocation7 [shape = 'u8[512]{0}', space=vmem, size = 0x400, scoped, tag = 'output window, operand 0, single buffered']
    %7 = vsyncpa [#allocation5], 0
    %8 = vsyncpa [#allocation3], 0
    %9 = vsyncpa [#allocation4], 0
    // Predicated region
    $region2: #{tpu_custom_call.1} parent=1 // pred_check
      _
    $region3: #{tpu_custom_call.1} parent=1 // pred_check_branch
      %11 = sbr.rel (0) target = $region5
    $region4: #{tpu_custom_call.1} parent=1 // pred_region
      %s13 = ssub.s32 16, 16
      %14 = vsyncadd [#allocation5], %s13
      %17 = dma.hbm_to_smem %s0, 16, [#allocation2], [#allocation5]
    $region5: #{tpu_custom_call.1} parent=1 // pred_fallthru
      _
    // Predicated region
    $region6: #{tpu_custom_call.1} parent=1 // pred_check
      _
    $region7: #{tpu_custom_call.1} parent=1 // pred_check_branch
      %19 = sbr.rel (0) target = $region9
    $region8: #{tpu_custom_call.1} parent=1 // pred_region
      %s21 = ssub.s32 128, 128
      %22 = vsyncadd [#allocation3], %s21
      %s24 = sshll.u32 [#allocation6], 4
      %s25 = int_to_ptr.vmem [resolvable:$true] %s24
      %27 = dma.hbm_to_vmem [thread:$0]  %s1, 128, %s25, [#allocation3]
    $region9: #{tpu_custom_call.1} parent=1 // pred_fallthru
      _
    // Predicated region
    $region10: #{tpu_custom_call.1} parent=1 // pred_check
      _
    $region11: #{tpu_custom_call.1} parent=1 // pred_check_branch
      %29 = sbr.rel (0) target = $region13
    $region12: #{tpu_custom_call.1} parent=1 // pred_region
      %30 = dma.done [#allocation5], 16
    $region13: #{tpu_custom_call.1} parent=1 // pred_fallthru
      _
    // Predicated region
    $region14: #{tpu_custom_call.1} parent=1 // pred_check
      _
    $region15: #{tpu_custom_call.1} parent=1 // pred_check_branch
      %32 = sbr.rel (0) target = $region17
    $region16: #{tpu_custom_call.1} parent=1 // pred_region
      %33 = dma.done [#allocation3], 128
    $region17: #{tpu_custom_call.1} parent=1 // pred_fallthru
      _
    %34 = sfence
    %v35 = vld [vmem:[#allocation6] sm:$0x3f]
    %s36 = sld [smem:[#allocation2 + $0x18]]
    %v37 = vstv %s36
    %s38 = sld [smem:[#allocation2]]
    %v39 = vstv %s38
    %v40 = vmul.f32 %v39, %v35
    %v41 = vadd.f32 %v37, %v40
    %s42 = sld [smem:[#allocation2 + $0x1]]
    %v43 = vstv %s42
    %v44 = vmul.f32 %v43, %v35
    %v46 = vrot.slane %v44, 1
    %v48 = vadd.f32 %v41, %v46
    %s49 = sld [smem:[#allocation2 + $0x2]]
    %v50 = vstv %s49
    %v51 = vmul.f32 %v50, %v35
    %v53 = vrot.slane %v51, 2
    %v55 = vadd.f32 %v48, %v53
    %s56 = sld [smem:[#allocation2 + $0x3]]
    %v57 = vstv %s56
    %v58 = vmul.f32 %v57, %v35
    %v60 = vrot.slane %v58, 3
    %v62 = vadd.f32 %v55, %v60
    %s63 = sld [smem:[#allocation2 + $0x4]]
    %v64 = vstv %s63
    %v65 = vmul.f32 %v64, %v35
    %v67 = vrot.slane %v65, 4
    %v69 = vadd.f32 %v62, %v67
    %s70 = sld [smem:[#allocation2 + $0x5]]
    %v71 = vstv %s70
    %v72 = vmul.f32 %v71, %v35
    %v74 = vrot.slane %v72, 5
    %v76 = vadd.f32 %v69, %v74
    %v77 = vxor.u32 %v76, 2147483648
    %v78 = vmul.f32 %v77, 1.442695
    %v79 = vpow.pop %v78
    %v80 = vadd.f32 %v79, 1.0
    %v81 = vrcp.pop %v80
    %v82 = vmul.f32 1.0, %v81
    %s83 = sld [smem:[#allocation2 + $0x19]]
    %v84 = vstv %s83
    %s85 = sld [smem:[#allocation2 + $0x6]]
    %v86 = vstv %s85
    %v87 = vmul.f32 %v86, %v35
    %v88 = vadd.f32 %v84, %v87
    %s89 = sld [smem:[#allocation2 + $0x7]]
    %v90 = vstv %s89
    %v91 = vmul.f32 %v90, %v35
    %v93 = vrot.slane %v91, 1
    %v95 = vadd.f32 %v88, %v93
    %s96 = sld [smem:[#allocation2 + $0x8]]
    %v97 = vstv %s96
    %v98 = vmul.f32 %v97, %v35
    %v100 = vrot.slane %v98, 2
    %v102 = vadd.f32 %v95, %v100
    %s103 = sld [smem:[#allocation2 + $0x9]]
    %v104 = vstv %s103
    %v105 = vmul.f32 %v104, %v35
    %v107 = vrot.slane %v105, 3
    %v109 = vadd.f32 %v102, %v107
    %s110 = sld [smem:[#allocation2 + $0xa]]
    %v111 = vstv %s110
    %v112 = vmul.f32 %v111, %v35
    %v114 = vrot.slane %v112, 4
    %v116 = vadd.f32 %v109, %v114
    %s117 = sld [smem:[#allocation2 + $0xb]]
    %v118 = vstv %s117
    %v119 = vmul.f32 %v118, %v35
    %v121 = vrot.slane %v119, 5
    %v123 = vadd.f32 %v116, %v121
    %v124 = vxor.u32 %v123, 2147483648
    %v125 = vmul.f32 %v124, 1.442695
    %v126 = vpow.pop %v125
    %v127 = vadd.f32 %v126, 1.0
    %v128 = vrcp.pop %v127
    %v129 = vmul.f32 1.0, %v128
    %s130 = sld [smem:[#allocation2 + $0x1a]]
    %v131 = vstv %s130
    %s132 = sld [smem:[#allocation2 + $0xc]]
    %v133 = vstv %s132
    %v134 = vmul.f32 %v133, %v35
    %v135 = vadd.f32 %v131, %v134
    %s136 = sld [smem:[#allocation2 + $0xd]]
    %v137 = vstv %s136
    %v138 = vmul.f32 %v137, %v35
    %v140 = vrot.slane %v138, 1
    %v142 = vadd.f32 %v135, %v140
    %s143 = sld [smem:[#allocation2 + $0xe]]
    %v144 = vstv %s143
    %v145 = vmul.f32 %v144, %v35
    %v147 = vrot.slane %v145, 2
    %v149 = vadd.f32 %v142, %v147
    %s150 = sld [smem:[#allocation2 + $0xf]]
    %v151 = vstv %s150
    %v152 = vmul.f32 %v151, %v35
    %v154 = vrot.slane %v152, 3
    %v156 = vadd.f32 %v149, %v154
    %s157 = sld [smem:[#allocation2 + $0x10]]
    %v158 = vstv %s157
    %v159 = vmul.f32 %v158, %v35
    %v161 = vrot.slane %v159, 4
    %v163 = vadd.f32 %v156, %v161
    %s164 = sld [smem:[#allocation2 + $0x11]]
    %v165 = vstv %s164
    %v166 = vmul.f32 %v165, %v35
    %v168 = vrot.slane %v166, 5
    %v170 = vadd.f32 %v163, %v168
    %v171 = vxor.u32 %v170, 2147483648
    %v172 = vmul.f32 %v171, 1.442695
    %v173 = vpow.pop %v172
    %v174 = vadd.f32 %v173, 1.0
    %v175 = vrcp.pop %v174
    %v176 = vmul.f32 1.0, %v175
    %s177 = sld [smem:[#allocation2 + $0x1b]]
    %v178 = vstv %s177
    %s179 = sld [smem:[#allocation2 + $0x12]]
    %v180 = vstv %s179
    %v181 = vmul.f32 %v180, %v35
    %v182 = vadd.f32 %v178, %v181
    %s183 = sld [smem:[#allocation2 + $0x13]]
    %v184 = vstv %s183
    %v185 = vmul.f32 %v184, %v35
    %v187 = vrot.slane %v185, 1
    %v189 = vadd.f32 %v182, %v187
    %s190 = sld [smem:[#allocation2 + $0x14]]
    %v191 = vstv %s190
    %v192 = vmul.f32 %v191, %v35
    %v194 = vrot.slane %v192, 2
    %v196 = vadd.f32 %v189, %v194
    %s197 = sld [smem:[#allocation2 + $0x15]]
    %v198 = vstv %s197
    %v199 = vmul.f32 %v198, %v35
    %v201 = vrot.slane %v199, 3
    %v203 = vadd.f32 %v196, %v201
    %s204 = sld [smem:[#allocation2 + $0x16]]
    %v205 = vstv %s204
    %v206 = vmul.f32 %v205, %v35
    %v208 = vrot.slane %v206, 4
    %v210 = vadd.f32 %v203, %v208
    %s211 = sld [smem:[#allocation2 + $0x17]]
    %v212 = vstv %s211
    %v213 = vmul.f32 %v212, %v35
    %v215 = vrot.slane %v213, 5
    %v217 = vadd.f32 %v210, %v215
    %v218 = vxor.u32 %v217, 2147483648
    %v219 = vmul.f32 %v218, 1.442695
    %v220 = vpow.pop %v219
    %v221 = vadd.f32 %v220, 1.0
    %v222 = vrcp.pop %v221
    %v223 = vmul.f32 1.0, %v222
    %s224 = sld [smem:[#allocation2 + $0x24]]
    %v225 = vstv %s224
    %s226 = sld [smem:[#allocation2 + $0x1c]]
    %v227 = vstv %s226
    %v228 = vmul.f32 %v227, %v82
    %v229 = vadd.f32 %v225, %v228
    %s230 = sld [smem:[#allocation2 + $0x1d]]
    %v231 = vstv %s230
    %v232 = vmul.f32 %v231, %v129
    %v233 = vadd.f32 %v229, %v232
    %s234 = sld [smem:[#allocation2 + $0x1e]]
    %v235 = vstv %s234
    %v236 = vmul.f32 %v235, %v176
    %v237 = vadd.f32 %v233, %v236
    %s238 = sld [smem:[#allocation2 + $0x1f]]
    %v239 = vstv %s238
    %v240 = vmul.f32 %v239, %v223
    %v241 = vadd.f32 %v237, %v240
    %v242 = vxor.u32 %v241, 2147483648
    %v243 = vmul.f32 %v242, 1.442695
    %v244 = vpow.pop %v243
    %v245 = vadd.f32 %v244, 1.0
    %v246 = vrcp.pop %v245
    %v247 = vmul.f32 1.0, %v246
    %s248 = sld [smem:[#allocation2 + $0x25]]
    %v249 = vstv %s248
    %s250 = sld [smem:[#allocation2 + $0x20]]
    %v251 = vstv %s250
    %v252 = vmul.f32 %v251, %v82
    %v253 = vadd.f32 %v249, %v252
    %s254 = sld [smem:[#allocation2 + $0x21]]
    %v255 = vstv %s254
    %v256 = vmul.f32 %v255, %v129
    %v257 = vadd.f32 %v253, %v256
    %s258 = sld [smem:[#allocation2 + $0x22]]
    %v259 = vstv %s258
    %v260 = vmul.f32 %v259, %v176
    %v261 = vadd.f32 %v257, %v260
    %s262 = sld [smem:[#allocation2 + $0x23]]
    %v263 = vstv %s262
    %v264 = vmul.f32 %v263, %v223
    %v265 = vadd.f32 %v261, %v264
    %v266 = vxor.u32 %v265, 2147483648
    %v267 = vmul.f32 %v266, 1.442695
    %v268 = vpow.pop %v267
    %v269 = vadd.f32 %v268, 1.0
    %v270 = vrcp.pop %v269
    %v271 = vmul.f32 1.0, %v270
    %s272 = sld [smem:[#allocation2 + $0x28]]
    %v273 = vstv %s272
    %s274 = sld [smem:[#allocation2 + $0x26]]
    %v275 = vstv %s274
    %v276 = vmul.f32 %v275, %v247
    %v277 = vadd.f32 %v273, %v276
    %s278 = sld [smem:[#allocation2 + $0x27]]
    %v279 = vstv %s278
    %v280 = vmul.f32 %v279, %v271
    %v281 = vadd.f32 %v277, %v280
    %v282 = vxor.u32 %v281, 2147483648
    %v283 = vmul.f32 %v282, 1.442695
    %v284 = vpow.pop %v283
    %v285 = vadd.f32 %v284, 1.0
    %v286 = vrcp.pop %v285
    %v287 = vmul.f32 1.0, %v286
    %288 = vst [vmem:[#allocation7] sm:$0x1] %v287
    // Predicated region
    $region18: #{tpu_custom_call.1} parent=1 // pred_check
      _
    $region19: #{tpu_custom_call.1} parent=1 // pred_check_branch
      %290 = sbr.rel (0) target = $region21
    $region20: #{tpu_custom_call.1} parent=1 // pred_region
      %s292 = ssub.s32 16, 16
      %293 = vsyncadd [#allocation4], %s292
      %s295 = sshll.u32 [#allocation7], 4
      %s296 = int_to_ptr.vmem [resolvable:$true] %s295
      %298 = dma.vmem_to_hbm [thread:$0]  %s296, 16, %s2, [#allocation4]
    $region21: #{tpu_custom_call.1} parent=1 // pred_fallthru
      _
    // Predicated region
    $region22: #{tpu_custom_call.1} parent=1 // pred_check
      _
    $region23: #{tpu_custom_call.1} parent=1 // pred_check_branch
      %300 = sbr.rel (0) target = $region25
    $region24: #{tpu_custom_call.1} parent=1 // pred_region
      %301 = dma.done [#allocation4], 16
    $region25: #{tpu_custom_call.1} parent=1 // pred_fallthru
      _
    %302 = vsyncpa [#allocation3], 1
    %303 = vsyncpa [#allocation4], 1
    %304 = vsyncpa [#allocation5], 1

</llo_original>
